<compile_context>
chip_gen: v7x
topology: tpu7x:2x2x1
jax: 0.10.0
libtpu: 0.0.40
codegen_flags: <defaults>
</compile_context>

<pallas_src>
import functools

import jax
import jax.numpy as jnp
from jax.experimental import pallas as pl
from jax.experimental.pallas import tpu as pltpu

_MAX_INPUT_BLOCK_BYTES = 4 * 1024 * 1024  # per-buffer input block cap (~3us DMA)


def _rmsnorm_kernel(x_ref, w_ref, o_ref, *, eps):
    # x_ref: (ROW_TILE, H) tile, w_ref: (1, H) float32 (pre-cast in wrapper)
    x_f32 = x_ref[...].astype(jnp.float32)
    # variance = mean(x^2) over hidden axis in float32 (matches torch)
    variance = jnp.mean(x_f32 * x_f32, axis=-1, keepdims=True)
    inv = jax.lax.rsqrt(variance + eps)
    o_ref[...] = (w_ref[...] * (x_f32 * inv)).astype(o_ref.dtype)


def _sublane_granularity(dtype):
    # packed sublane count: 8 for 32-bit, 16 for bf16/fp16, 32 for int8/fp8
    itemsize = jnp.dtype(dtype).itemsize
    return max(8, 32 // max(itemsize, 1))


def _round_up(x, m):
    return ((x + m - 1) // m) * m


def _vmem_capacity_bytes():
    try:
        info = pltpu.get_tpu_info()
        cap = getattr(info, "vmem_capacity_bytes", None)
        if cap:
            return int(cap)
    except Exception:
        pass
    # Conservative (v7x-sized, 64 MiB) fallback if the query is unavailable.
    return 64 * 1024 * 1024


def _pick_row_tile(rows, hidden, in_dtype, out_dtype, budget_bytes, gran):
    """Largest row tile whose double-buffered in+out blocks fit the budget."""
    in_row = hidden * jnp.dtype(in_dtype).itemsize
    out_row = hidden * jnp.dtype(out_dtype).itemsize
    per_row = 2 * (in_row + out_row)          # double-buffered input + output
    weight_bytes = 2 * hidden * 4             # (double-buffered) f32 weight row
    avail = max(budget_bytes - weight_bytes, per_row * gran)
    tile = max(gran, (avail // per_row) // gran * gran)
    # Cap the per-buffer input block size: big enough to amortize the
    # ~0.35us/step grid overhead, small enough to keep several steps in flight.
    cap_rows = max(gran, (_MAX_INPUT_BLOCK_BYTES // max(in_row, 1)) // gran * gran)
    tile = min(tile, cap_rows)
    # Never bigger than the (rounded-up) number of rows we actually have.
    tile = min(tile, max(gran, _round_up(rows, gran)))
    # Keep >= 2 grid steps when there is enough work (megacore sharding on v7x).
    if rows > 2 * gran and rows // tile < 2:
        tile = max(gran, _round_up(pl.cdiv(rows, 2), gran))
    return tile


def rmsnorm(x, weight, eps=1e-6, row_tile=None, out_dtype=None):
    """RMSNorm over the last axis of x. x: (..., H), weight: (H,)."""
    orig_shape = x.shape
    hidden = orig_shape[-1]
    rows = 1
    for d in orig_shape[:-1]:
        rows *= d

    if out_dtype is None:
        # Torch semantics: x promotes to f32 against rsqrt, then weight * x.
        out_dtype = jnp.promote_types(
            jnp.promote_types(x.dtype, jnp.float32), weight.dtype
        )
    out_dtype = jnp.dtype(out_dtype)

    if rows == 0:
        return jnp.zeros(orig_shape, out_dtype)

    x2d = x.reshape(rows, hidden)
    w2d = weight.astype(jnp.float32).reshape(1, hidden)

    gran = max(_sublane_granularity(x.dtype), _sublane_granularity(out_dtype))
    vmem_cap = _vmem_capacity_bytes()
    if row_tile is None:
        row_tile = _pick_row_tile(rows, hidden, x.dtype, out_dtype,
                                  vmem_cap // 2, gran)
    else:
        row_tile = max(gran, _round_up(int(row_tile), gran))

    # Non-divisible grids are fine: the boundary block is masked by Pallas
    # (rows are independent, out-of-bounds writes are dropped), so no padding
    # copy of the whole array is ever made.
    grid = (pl.cdiv(rows, row_tile),)

    in_row = hidden * jnp.dtype(x.dtype).itemsize
    out_row = hidden * out_dtype.itemsize
    needed = 2 * row_tile * (in_row + out_row) + 2 * hidden * 4
    vmem_limit = min(int(vmem_cap * 3 // 4),
                     max(needed + 4 * 1024 * 1024, 16 * 1024 * 1024))

    # TODO(synk): for hidden < 128 the output block's last dim is lane-sparse
    # (masked vst); a lane-dense repack (fold several rows into one 128-lane
    # row inside the kernel) would speed up the store path but is pure layout
    # plumbing, skipped here.

    out = pl.pallas_call(
        functools.partial(_rmsnorm_kernel, eps=eps),
        out_shape=jax.ShapeDtypeStruct((rows, hidden), out_dtype),
        grid_spec=pltpu.PrefetchScalarGridSpec(
            num_scalar_prefetch=0,
            grid=grid,
            in_specs=[
                pl.BlockSpec((row_tile, hidden), lambda i: (i, 0)),
                pl.BlockSpec((1, hidden), lambda i: (0, 0)),
            ],
            out_specs=pl.BlockSpec((row_tile, hidden), lambda i: (i, 0)),
        ),
        compiler_params=pltpu.CompilerParams(
            dimension_semantics=("parallel",),
            vmem_limit_bytes=int(vmem_limit),
        ),
    )(x2d, w2d)

    return out.reshape(orig_shape[:-1] + (hidden,))


def rmsnorm_ref(x, weight, eps=1e-6):
    """Pure-JAX reference mirroring the PyTorch forward."""
    x_f32 = x.astype(jnp.float32)
    variance = jnp.mean(x_f32 * x_f32, axis=-1, keepdims=True)
    y = x_f32 * jax.lax.rsqrt(variance + eps)
    return weight.astype(jnp.float32) * y


if __name__ == "__main__":
    batch, seq, hidden = 2, 8, 32
    key = jax.random.PRNGKey(0)
    x = jax.random.normal(key, (batch, seq, hidden), dtype=jnp.float32)
    # nn.Parameter(torch.ones(hidden_size)) -> deterministic ones init
    weight = jnp.ones((hidden,), dtype=jnp.float32)

    out = jax.block_until_ready(rmsnorm(x, weight, eps=1e-6))
    ref = rmsnorm_ref(x, weight, eps=1e-6)
    assert out.shape == x.shape and out.dtype == ref.dtype
    assert jnp.allclose(out, ref, atol=1e-5, rtol=1e-5), "mismatch vs reference"

    # Ragged row count (15 rows): exercises the masked boundary block.
    x_odd = jax.random.normal(jax.random.PRNGKey(1), (3, 5, hidden), jnp.float32)
    out_odd = jax.block_until_ready(rmsnorm(x_odd, weight, eps=1e-6))
    assert jnp.allclose(out_odd, rmsnorm_ref(x_odd, weight), atol=1e-5, rtol=1e-5)

    # Multi-step grid with a partial last block (explicit small row tile).
    out_tiled = jax.block_until_ready(rmsnorm(x_odd, weight, row_tile=8))
    assert jnp.allclose(out_tiled, rmsnorm_ref(x_odd, weight), atol=1e-5, rtol=1e-5)

    # bf16 input path (f32 compute, torch-style promotion -> f32 output).
    x_bf16 = x.astype(jnp.bfloat16)
    out_bf16 = jax.block_until_ready(rmsnorm(x_bf16, weight))
    assert out_bf16.dtype == jnp.float32
    assert jnp.allclose(out_bf16, rmsnorm_ref(x_bf16, weight), atol=1e-4, rtol=1e-4)

    print("KERNEL_OK")
</pallas_src>

<mosaic_0001>
module attributes {stable_mosaic.version = 11 : i64} {
  func.func @_rmsnorm_kernel(%arg0: i32, %arg1: memref<16x32xf32, #tpu.memory_space<vmem>>, %arg2: memref<1x32xf32, #tpu.memory_space<vmem>>, %arg3: memref<16x32xf32, #tpu.memory_space<vmem>>) attributes {dimension_semantics = [#tpu.dimension_semantics<parallel>], iteration_bounds = array<i64: 1>, scalar_prefetch = 0 : i64, scratch_operands = 0 : i64, tpu.core_type = #tpu.core_type<tc>, window_params = [{transform_indices = @transform_0, window_bounds = array<i64: 16, 32>}, {pipeline_mode = #tpu.pipeline_mode<synchronous>, transform_indices = @transform_1, window_bounds = array<i64: 1, 32>}, {transform_indices = @transform_2, window_bounds = array<i64: 16, 32>}]} {
    %c0 = arith.constant 0 : index
    %c0_0 = arith.constant 0 : index
    %0 = vector.load %arg1[%c0, %c0_0] : memref<16x32xf32, #tpu.memory_space<vmem>>, vector<16x32xf32>
    %1 = arith.mulf %0, %0 : vector<16x32xf32>
    %cst = arith.constant dense<0.000000e+00> : vector<16xf32>
    %2 = vector.multi_reduction <add>, %1, %cst [1] : vector<16x32xf32> to vector<16xf32>
    %3 = vector.shape_cast %2 : vector<16xf32> to vector<16x1xf32>
    %cst_1 = arith.constant 3.200000e+01 : f32
    %4 = vector.broadcast %cst_1 : f32 to vector<16x1xf32>
    %5 = arith.divf %3, %4 : vector<16x1xf32>
    %cst_2 = arith.constant 9.99999997E-7 : f32
    %6 = vector.broadcast %cst_2 : f32 to vector<16x1xf32>
    %7 = arith.addf %5, %6 : vector<16x1xf32>
    %8 = math.rsqrt %7 : vector<16x1xf32>
    %c0_3 = arith.constant 0 : index
    %c0_4 = arith.constant 0 : index
    %9 = vector.load %arg2[%c0_3, %c0_4] : memref<1x32xf32, #tpu.memory_space<vmem>>, vector<1x32xf32>
    %10 = vector.broadcast %8 : vector<16x1xf32> to vector<16x32xf32>
    %11 = arith.mulf %0, %10 : vector<16x32xf32>
    %12 = vector.broadcast %9 : vector<1x32xf32> to vector<16x32xf32>
    %13 = arith.mulf %12, %11 : vector<16x32xf32>
    %c0_5 = arith.constant 0 : index
    %c0_6 = arith.constant 0 : index
    %14 = vector.load %arg3[%c0_5, %c0_6] : memref<16x32xf32, #tpu.memory_space<vmem>>, vector<16x32xf32>
    tpu.vector_store %arg3[%c0_5, %c0_6], %13 {strides = array<i32>} : memref<16x32xf32, #tpu.memory_space<vmem>>, vector<16x32xf32>,
    return
  }
  func.func @transform_0(%arg0: i32) -> (i32, i32) {
    %c0_i32 = arith.constant 0 : i32
    %c0_i32_0 = arith.constant 0 : i32
    return %arg0, %c0_i32 : i32, i32
  }
  func.func @transform_1(%arg0: i32) -> (i32, i32) {
    %c0_i32 = arith.constant 0 : i32
    %c0_i32_0 = arith.constant 0 : i32
    %c0_i32_1 = arith.constant 0 : i32
    return %c0_i32, %c0_i32_0 : i32, i32
  }
  func.func @transform_2(%arg0: i32) -> (i32, i32) {
    %c0_i32 = arith.constant 0 : i32
    %c0_i32_0 = arith.constant 0 : i32
    return %arg0, %c0_i32 : i32, i32
  }
}

</mosaic_0001>

<llo_original>
// kernel: tpu_custom_call.1
$region0: #{tpu_custom_call.1}
  #allocation0 [shape = 'u32[]', space=smem, size = 0x4, offset = 0x4, fixed_abs, tag = 'smem constant byte address 0x4 - core index']
  #allocation1 [shape = 'u32[144,128]{1,0:T(1,128)}', space=vmem, size = 0x12000, scoped, tag = 'internal scratch']
  %s0 = inlined_call_operand.hbm [shape: f32[16,32], index: 0, kind: input, shape index: {}]
  %s1 = inlined_call_operand.vmem [shape: f32[1,32], index: 1, kind: input, shape index: {}]
  %s2 = inlined_call_operand.hbm [shape: f32[16,32], index: 2, kind: output, shape index: {}]
  %s3 = sld [smem:[#allocation0]]
  $region22: #{tpu_custom_call.1} parent=0
    _
  %s5 = ssub.s32 1, %s3
  %s6 = scalar_select 0, %s5, %s3
  $region1: #{tpu_custom_call.1} parent=0
    #allocation2 [shape = 'u8[8192]{0}', space=vmem, size = 0x2000, scoped, tag = 'input window, operand 0, single buffered']
    #allocation3 [shape = 's32[1]{0}', space=sflag, size = 0x4, scoped, tag = 'scoped memory for tpu_custom_call.1']
    #allocation4 [shape = 's32[1]{0}', space=sflag, size = 0x4, scoped, tag = 'scoped memory for tpu_custom_call.1']
    #allocation5 [shape = 'u8[8192]{0}', space=vmem, size = 0x2000, scoped, tag = 'output window, operand 0, single buffered']
    %7 = vsyncpa [#allocation3], 0
    %8 = vsyncpa [#allocation4], 0
    // Predicated region
    $region2: #{tpu_custom_call.1} parent=1 // pred_check
      _
    $region3: #{tpu_custom_call.1} parent=1 // pred_check_branch
      %10 = sbr.rel (0) target = $region5
    $region4: #{tpu_custom_call.1} parent=1 // pred_region
      %s12 = ssub.s32 256, 256
      %13 = vsyncadd [#allocation3], %s12
      %s14 = sshll.u32 [#allocation2], 4
      %s15 = int_to_ptr.vmem [resolvable:$true] %s14
      %20 = dma.hbm_to_vmem [thread:$0]  %s0, 256, %s15, [#allocation3], 128, 128, 8
    $region5: #{tpu_custom_call.1} parent=1 // pred_fallthru
      _
    // Predicated region
    $region6: #{tpu_custom_call.1} parent=1 // pred_check
      _
    $region7: #{tpu_custom_call.1} parent=1 // pred_check_branch
      %22 = sbr.rel (0) target = $region9
    $region8: #{tpu_custom_call.1} parent=1 // pred_region
      _
    $region9: #{tpu_custom_call.1} parent=1 // pred_fallthru
      _
    // Predicated region
    $region10: #{tpu_custom_call.1} parent=1 // pred_check
      _
    $region11: #{tpu_custom_call.1} parent=1 // pred_check_branch
      %24 = sbr.rel (0) target = $region13
    $region12: #{tpu_custom_call.1} parent=1 // pred_region
      %25 = dma.done [#allocation3], 256
    $region13: #{tpu_custom_call.1} parent=1 // pred_fallthru
      _
    %v26 = vld [vmem:[#allocation2] sm:$0xff]
    %v27 = vld [vmem:[#allocation2 + $0x8] sm:$0xff]
    %v28 = vmul.f32 %v26, %v26
    %v29 = vmul.f32 %v27, %v27
    %vm30 = vcmask 261120
    %v31 = vsel %vm30, %v28, 0.0
    %32 = vadd.xlane.f32.xlu0 %v31
    %v33 = vpop.xlane.xlu0 %32
    %v34 = vsel %vm30, %v29, 0.0
    %35 = vadd.xlane.f32.xlu0 %v34
    %v36 = vpop.xlane.xlu0 %35
    %v37 = vrcp.pop 32.0
    %v38 = vmul.f32 %v33, %v37
    %v39 = vmul.f32 %v36, %v37
    %v40 = vadd.f32 %v38, 1e-06
    %v41 = vadd.f32 %v39, 1e-06
    %v42 = vrsqrt.pop %v40
    %v43 = vrsqrt.pop %v41
    %v44 = vld [vmem:[%s1] sm:$0x1]
    %v45 = vmul.f32 %v26, %v42
    %v46 = vmul.f32 %v27, %v43
    %v48 = vlaneseq
    %v49 = vshrl.u32 %v48, 7
    %v50 = vsub.s32 0, %v49
    %v51 = vrot.slane %v44, %v50
    %v53 = vmul.f32 %v51, %v45
    %v54 = vmul.f32 %v51, %v46
    %55 = vst.msk [vmem:[#allocation5] sm:$0xff] %vm30, %v53
    %56 = vst.msk [vmem:[#allocation5 + $0x8] sm:$0xff] %vm30, %v54
    // Predicated region
    $region14: #{tpu_custom_call.1} parent=1 // pred_check
      _
    $region15: #{tpu_custom_call.1} parent=1 // pred_check_branch
      %58 = sbr.rel (0) target = $region17
    $region16: #{tpu_custom_call.1} parent=1 // pred_region
      %s60 = ssub.s32 256, 256
      %61 = vsyncadd [#allocation4], %s60
      %s62 = sshll.u32 [#allocation5], 4
      %s63 = int_to_ptr.vmem [resolvable:$true] %s62
      %68 = dma.vmem_to_hbm [thread:$0]  %s63, 256, %s2, [#allocation4], 128, 128, 8
    $region17: #{tpu_custom_call.1} parent=1 // pred_fallthru
      _
    // Predicated region
    $region18: #{tpu_custom_call.1} parent=1 // pred_check
      _
    $region19: #{tpu_custom_call.1} parent=1 // pred_check_branch
      %70 = sbr.rel (0) target = $region21
    $region20: #{tpu_custom_call.1} parent=1 // pred_region
      %71 = dma.done [#allocation4], 256
    $region21: #{tpu_custom_call.1} parent=1 // pred_fallthru
      _
    %72 = vsyncpa [#allocation3], 1
    %73 = vsyncpa [#allocation4], 1

</llo_original>
